<compile_context>
chip_gen: v7x
topology: tpu7x:2x2x1
jax: 0.10.0
libtpu: 0.0.40
codegen_flags: <defaults>
</compile_context>

<pallas_src>
import functools

import jax
import jax.numpy as jnp
import numpy as np
from jax.experimental import pallas as pl
from jax.experimental.pallas import tpu as pltpu


_IGNORE_INDEX = 253


def _round_up(x, m):
    return ((x + m - 1) // m) * m


# ----------------------------------------------------------------------------- #
# Kernel 1: weighted cross entropy with ignore_index (F.cross_entropy semantics) #
# Layout: logits [C, N] (N lane-dense), targets [1, N] int32, weight [C, 1].      #
# Grid tiles N; scratch accumulates loss_sum / weight_sum; the normalized scalar  #
# is written once at the last step (division done in-kernel).                     #
# ----------------------------------------------------------------------------- #
def _ce_kernel(logits_ref, tgt_ref, w_ref, out_ref, acc_loss, acc_w, *, ignore_index):
    i = pl.program_id(0)

    @pl.when(i == 0)
    def _init():
        acc_loss[...] = jnp.zeros_like(acc_loss)
        acc_w[...] = jnp.zeros_like(acc_w)

    x = logits_ref[...].astype(jnp.float32)          # [C, TN]
    t = tgt_ref[...]                                 # [1, TN] int32
    w = w_ref[...].astype(jnp.float32)               # [C, 1]
    c, tn = x.shape

    col_max = jnp.max(x, axis=0, keepdims=True)      # [1, TN]
    lse = col_max + jnp.log(jnp.sum(jnp.exp(x - col_max), axis=0, keepdims=True))

    cls_iota = jax.lax.broadcasted_iota(jnp.int32, (c, tn), 0)
    onehot = (cls_iota == t).astype(jnp.float32)     # [C, TN]
    x_t = jnp.sum(x * onehot, axis=0, keepdims=True)  # logit at target class
    w_t = jnp.sum(w * onehot, axis=0, keepdims=True)  # weight of target class
    valid = (t != ignore_index).astype(jnp.float32)   # ignore_index (also kills padding)

    acc_loss[...] = acc_loss[...] + jnp.sum((lse - x_t) * w_t * valid)
    acc_w[...] = acc_w[...] + jnp.sum(w_t * valid)

    @pl.when(i == pl.num_programs(0) - 1)
    def _fin():
        ls = acc_loss[...]
        ws = acc_w[...]
        out_ref[...] = jnp.where(ws > 0.0, ls / ws, jnp.zeros_like(ls))


def weighted_cross_entropy(logits_cn, targets_1n, weight_c1,
                           *, ignore_index=_IGNORE_INDEX, tile_n=2048):
    """logits_cn: [C, N] f32, targets_1n: [1, N] i32, weight_c1: [C, 1] f32 -> scalar."""
    c, n = logits_cn.shape
    tn = min(_round_up(n, 128), _round_up(tile_n, 128))
    n_pad = _round_up(n, tn)
    if n_pad != n:
        logits_cn = jnp.pad(logits_cn, ((0, 0), (0, n_pad - n)))
        targets_1n = jnp.pad(targets_1n, ((0, 0), (0, n_pad - n)),
                             constant_values=ignore_index)

    out = pl.pallas_call(
        functools.partial(_ce_kernel, ignore_index=ignore_index),
        grid=(n_pad // tn,),
        in_specs=[
            pl.BlockSpec((c, tn), lambda i: (0, i)),
            pl.BlockSpec((1, tn), lambda i: (0, i)),
            pl.BlockSpec((c, 1), lambda i: (0, 0)),
        ],
        out_specs=pl.BlockSpec((1, 1), lambda i: (0, 0)),
        out_shape=jax.ShapeDtypeStruct((1, 1), jnp.float32),
        scratch_shapes=[pltpu.VMEM((1, 1), jnp.float32),
                        pltpu.VMEM((1, 1), jnp.float32)],
        compiler_params=pltpu.CompilerParams(
            dimension_semantics=("arbitrary",),
            vmem_limit_bytes=32 * 1024 * 1024,
        ),
    )(logits_cn, targets_1n, weight_c1)
    return out[0, 0]


# ----------------------------------------------------------------------------- #
# Kernel 2: sigmoid BCE-with-logits + DICE, per batch element, P tiled.           #
#   inputs : valid  [B, M_pad, 1] f32, maps [B, M_pad, P_pad] bf16,                #
#            tgts   [B, M_pad, P_pad] int8                                          #
#   grid   : (B, P_pad // P_TILE)  -- batch parallel, P reduction last/arbitrary   #
#   scratch: per-mask partial sums (bce, p*t, p, t), finalized at last P tile.     #
# ----------------------------------------------------------------------------- #
def _mask_kernel(valid_ref, maps_ref, tgt_ref, ce_ref, dice_ref,
                 acc_bce, acc_pt, acc_p, acc_t, *, p_true, p_padded):
    pt_idx = pl.program_id(1)

    @pl.when(pt_idx == 0)
    def _init():
        acc_bce[...] = jnp.zeros_like(acc_bce)
        acc_pt[...] = jnp.zeros_like(acc_pt)
        acc_p[...] = jnp.zeros_like(acc_p)
        acc_t[...] = jnp.zeros_like(acc_t)

    x = maps_ref[0].astype(jnp.float32)    # [M_pad, P_TILE]  (bf16 in HBM)
    t = tgt_ref[0].astype(jnp.float32)     # [M_pad, P_TILE]  (int8 in HBM)
    m_pad, p_tile = x.shape

    # One shared transcendental: e = exp(-|x|) feeds both BCE and sigmoid.
    e = jnp.exp(-jnp.abs(x))
    bce = jnp.maximum(x, 0.0) - x * t + jnp.log1p(e)         # stable BCE-with-logits
    inv = pl.reciprocal(1.0 + e, approx=True)                 # EUP approx reciprocal
    p = jnp.where(x >= 0.0, inv, e * inv)                     # sigmoid(x)

    if p_padded != p_true:                                     # mask out padded points
        lane = jax.lax.broadcasted_iota(jnp.int32, (m_pad, p_tile), 1)
        pmask = ((pt_idx * p_tile + lane) < p_true).astype(jnp.float32)
        bce = bce * pmask
        p = p * pmask
        t = t * pmask

    acc_bce[...] += jnp.sum(bce, axis=-1, keepdims=True)
    acc_pt[...] += jnp.sum(p * t, axis=-1, keepdims=True)
    acc_p[...] += jnp.sum(p, axis=-1, keepdims=True)
    acc_t[...] += jnp.sum(t, axis=-1, keepdims=True)

    @pl.when(pt_idx == pl.num_programs(1) - 1)
    def _fin():
        v = valid_ref[0].astype(jnp.float32)                   # [M_pad, 1]
        # .mean(1).sum() over valid masks (mean over the true point count).
        ce_ref[0, 0] = jnp.sum(acc_bce[...] * v) * (1.0 / p_true)
        dice = 1.0 - (2.0 * acc_pt[...] + 1.0) / (acc_p[...] + acc_t[...] + 1.0)
        dice_ref[0, 0] = jnp.sum(dice * v)


def mask_losses(maps_bf16, tmasks_i8, valid_f32, *, p_true,
                vmem_input_budget_bytes=20 * 1024 * 1024):
    """maps: [B,M,P] bf16, tmasks: [B,M,P] i8, valid: [B,M,1] f32 -> (ce_sum, dice_sum) [B,1]."""
    b, m_pad, p0 = maps_bf16.shape
    bytes_per_point = m_pad * (maps_bf16.dtype.itemsize + tmasks_i8.dtype.itemsize)
    # 2 inputs x 2 pipeline buffers must fit the budget (conservative for v7x's 64 MiB VMEM).
    budget_points = (vmem_input_budget_bytes // (2 * bytes_per_point)) // 128 * 128
    p_tile = int(max(128, min(_round_up(p0, 128), budget_points)))
    p_padded = _round_up(p0, p_tile)
    if p_padded != p0:
        maps_bf16 = jnp.pad(maps_bf16, ((0, 0), (0, 0), (0, p_padded - p0)))
        tmasks_i8 = jnp.pad(tmasks_i8, ((0, 0), (0, 0), (0, p_padded - p0)))

    kernel = functools.partial(_mask_kernel, p_true=p_true, p_padded=p_padded)
    ce_sum, dice_sum = pl.pallas_call(
        kernel,
        grid=(b, p_padded // p_tile),
        in_specs=[
            pl.BlockSpec((1, m_pad, 1), lambda i, j: (i, 0, 0)),
            pl.BlockSpec((1, m_pad, p_tile), lambda i, j: (i, 0, j)),
            pl.BlockSpec((1, m_pad, p_tile), lambda i, j: (i, 0, j)),
        ],
        out_specs=[
            pl.BlockSpec((1, 1), lambda i, j: (i, 0)),
            pl.BlockSpec((1, 1), lambda i, j: (i, 0)),
        ],
        out_shape=[
            jax.ShapeDtypeStruct((b, 1), jnp.float32),
            jax.ShapeDtypeStruct((b, 1), jnp.float32),
        ],
        scratch_shapes=[pltpu.VMEM((m_pad, 1), jnp.float32)] * 4,
        compiler_params=pltpu.CompilerParams(
            dimension_semantics=("parallel", "arbitrary"),
            vmem_limit_bytes=32 * 1024 * 1024,
        ),
    )(valid_f32, maps_bf16, tmasks_i8)
    return ce_sum, dice_sum


# ----------------------------------------------------------------------------- #
# SetCriterion (JAX/Pallas)                                                       #
# ----------------------------------------------------------------------------- #
class SetCriterionPallas:
    def __init__(self, train_is_true, num_classes, eos_coef, class_weights=-1,
                 num_points=-1, enable_baseline_clustering=False):
        self.train_is_true = train_is_true
        self.num_classes = num_classes - 1          # index of the no-object class
        self.num_points = num_points
        self.enable_baseline_clustering = enable_baseline_clustering
        empty_weight = np.ones(self.num_classes + 1, dtype=np.float32)
        empty_weight[-1] = eos_coef
        if class_weights != -1:
            assert len(class_weights) == self.num_classes, "CLASS WEIGHTS DO NOT MATCH"
            empty_weight[:-1] = np.asarray(class_weights, dtype=np.float32)
        self.empty_weight = jnp.asarray(empty_weight)
        # TODO(synk): Queue file-backed feature store (torch.save/load of store.pt) and the
        # clustering (cdist + hinge-embedding) loss are not translated; with
        # enable_baseline_clustering=False the original module returns c_loss = 0.
        # TODO(synk): num_points != -1 (random point subsampling) is not translated; the
        # deterministic num_points == -1 (all points) branch is implemented.

    def loss_labels(self, outputs, targets, indices):
        pred_logits = outputs["pred_logits"].astype(jnp.float32)   # [B, Q, C]
        b, q, c = pred_logits.shape
        target_classes = jnp.full((b, q), self.num_classes, dtype=jnp.int32)
        for bi, (src, tgt) in enumerate(indices):
            src = np.asarray(src)
            tgt = jnp.asarray(np.asarray(tgt), dtype=jnp.int32)
            lbl = jnp.take(targets[bi]["labels"].astype(jnp.int32), tgt, axis=0)
            target_classes = target_classes.at[bi, src].set(lbl)
        logits_cn = pred_logits.reshape(b * q, c).T                # [C, N] lane-dense in N
        targets_1n = target_classes.reshape(1, b * q)
        weight_c1 = self.empty_weight.reshape(c, 1)
        return {"loss_ce": weighted_cross_entropy(logits_cn, targets_1n, weight_c1)}

    def loss_masks(self, outputs, targets, indices, num_masks_global):
        pred_masks = outputs["pred_masks"]                         # [B, P, Q]
        b, p, q = pred_masks.shape
        pm_bf16 = pred_masks.astype(jnp.bfloat16)                  # halve HBM traffic
        m_max = max(max(len(np.asarray(src)) for (src, _) in indices), 1)
        m_pad = _round_up(m_max, 32)                               # int8 sublane tile

        maps_l, tgts_l, valid_l, denom_l = [], [], [], []
        for bi, (src, tgt) in enumerate(indices):
            src_idx = jnp.asarray(np.asarray(src), dtype=jnp.int32)
            tgt_idx = jnp.asarray(np.asarray(tgt), dtype=jnp.int32)
            m = int(np.asarray(src).shape[0])
            mp = jnp.take(pm_bf16[bi], src_idx, axis=1).T                          # [M, P] bf16
            tm = jnp.take(targets[bi]["masks"].astype(jnp.int8), tgt_idx, axis=0)  # [M, P] i8
            lbl = jnp.take(targets[bi]["labels"], tgt_idx, axis=0)
            if self.train_is_true:
                # Ragged label!=253 filter handled as an in-kernel validity mask
                # (avoids ragged stacks and host syncs); denominator guarded against 0.
                keep = (lbl != _IGNORE_INDEX).astype(jnp.float32)
                denom = jnp.maximum(jnp.sum(keep), 1.0)
            else:
                keep = jnp.ones((m,), jnp.float32)
                denom = jnp.asarray(num_masks_global, jnp.float32)
            maps_l.append(jnp.pad(mp, ((0, m_pad - m), (0, 0))))
            tgts_l.append(jnp.pad(tm, ((0, m_pad - m), (0, 0))))
            valid_l.append(jnp.pad(keep, (0, m_pad - m)))
            denom_l.append(denom)

        maps = jnp.stack(maps_l)                                   # [B, M_pad, P] bf16
        tmasks = jnp.stack(tgts_l)                                 # [B, M_pad, P] int8
        valid = jnp.stack(valid_l)[..., None]                      # [B, M_pad, 1] f32
        denom = jnp.stack(denom_l)                                 # [B]
        ce_sum, dice_sum = mask_losses(maps, tmasks, valid, p_true=p)
        return {"loss_mask": jnp.sum(ce_sum[:, 0] / denom),
                "loss_dice": jnp.sum(dice_sum[:, 0] / denom)}

    def forward(self, outputs, targets, indices, iteration=0):
        num_masks = sum(int(t["labels"].shape[0]) for t in targets)
        num_masks = max(float(num_masks), 1.0)
        losses = {}
        losses.update(self.loss_labels(outputs, targets, indices))
        losses.update(self.loss_masks(outputs, targets, indices, num_masks))
        # clustering loss: disabled branch of get_clustering_loss
        losses["c_loss"] = jnp.zeros((), dtype=jnp.float32)
        return losses


# ----------------------------------------------------------------------------- #
# Reference (numpy) for correctness sanity check                                  #
# ----------------------------------------------------------------------------- #
def _ref_losses(outputs, targets, indices, criterion, num_masks_global):
    logits = np.asarray(outputs["pred_logits"], dtype=np.float32)
    b, q, c = logits.shape
    tc = np.full((b, q), criterion.num_classes, dtype=np.int64)
    for bi, (src, tgt) in enumerate(indices):
        tc[bi, np.asarray(src)] = np.asarray(targets[bi]["labels"])[np.asarray(tgt)]
    flat = logits.reshape(b * q, c)
    t = tc.reshape(-1)
    mx = flat.max(axis=-1, keepdims=True)
    logp = flat - mx - np.log(np.exp(flat - mx).sum(axis=-1, keepdims=True))
    w = np.asarray(criterion.empty_weight)
    valid = (t != _IGNORE_INDEX)
    t_safe = np.where(valid, t, 0)
    nll = -logp[np.arange(b * q), t_safe] * w[t_safe]
    loss_ce = (nll * valid).sum() / (w[t_safe] * valid).sum()

    # Mask losses, with pred-mask logits quantized through bf16 (matching kernel storage).
    pm = np.asarray(outputs["pred_masks"].astype(jnp.bfloat16).astype(jnp.float32))
    loss_mask, loss_dice = 0.0, 0.0
    for bi, (src, tgt) in enumerate(indices):
        src = np.asarray(src)
        tgt = np.asarray(tgt)
        m = pm[bi][:, src].T
        tm = np.asarray(targets[bi]["masks"])[tgt].astype(np.float32)
        if criterion.train_is_true:
            keep = np.asarray(targets[bi]["labels"])[tgt] != _IGNORE_INDEX
            m = m[keep]
            tm = tm[keep]
            nm = max(float(m.shape[0]), 1.0)
        else:
            nm = float(num_masks_global)
        bce = np.maximum(m, 0.0) - m * tm + np.log1p(np.exp(-np.abs(m)))
        loss_mask += bce.mean(axis=1).sum() / nm
        p_sig = 1.0 / (1.0 + np.exp(-m))
        numer = 2.0 * (p_sig * tm).sum(-1)
        denom = p_sig.sum(-1) + tm.sum(-1)
        loss_dice += (1.0 - (numer + 1.0) / (denom + 1.0)).sum() / nm
    return {"loss_ce": loss_ce, "loss_mask": loss_mask, "loss_dice": loss_dice}


# ----------------------------------------------------------------------------- #
if __name__ == "__main__":
    key = jax.random.PRNGKey(0)
    B, Q, C, P, M = 2, 8, 20, 256, 4   # batch, queries, classes(incl. no-object), points, matched masks

    k1, k2, k3, k4 = jax.random.split(key, 4)
    pred_logits = jax.random.normal(k1, (B, Q, C), dtype=jnp.float32)
    pred_masks = jax.random.normal(k2, (B, P, Q), dtype=jnp.float32)
    refin_queries = jax.random.normal(k3, (B, Q, 128), dtype=jnp.float32)  # unused (clustering off)
    outputs = {"pred_logits": pred_logits, "pred_masks": pred_masks, "refin_queries": refin_queries}

    labels = jax.random.randint(k4, (B, M), 0, C - 1, dtype=jnp.int32)
    labels = labels.at[0, 1].set(253)   # exercise ignore_index + train-time mask filtering
    masks = (jax.random.uniform(jax.random.fold_in(key, 7), (B, M, P)) > 0.5).astype(jnp.float32)
    targets = [{"labels": labels[bi], "masks": masks[bi]} for bi in range(B)]

    # Deterministic matcher output (the Hungarian matcher is an external dependency):
    # queries (0,2,4,6) matched to targets (0,1,2,3) in each batch element.
    indices = [(np.array([0, 2, 4, 6]), np.arange(M)) for _ in range(B)]

    criterion = SetCriterionPallas(
        train_is_true=True, num_classes=C, eos_coef=0.1, class_weights=-1,
        num_points=-1, enable_baseline_clustering=False,
    )

    losses = criterion.forward(outputs, targets, indices, iteration=0)
    losses = jax.tree_util.tree_map(jax.block_until_ready, losses)

    num_masks_global = max(float(sum(int(t["labels"].shape[0]) for t in targets)), 1.0)
    ref = _ref_losses(outputs, targets, indices, criterion, num_masks_global)
    np.testing.assert_allclose(np.asarray(losses["loss_ce"]), ref["loss_ce"], rtol=1e-4, atol=1e-5)
    np.testing.assert_allclose(np.asarray(losses["loss_mask"]), ref["loss_mask"], rtol=5e-3, atol=5e-3)
    np.testing.assert_allclose(np.asarray(losses["loss_dice"]), ref["loss_dice"], rtol=5e-3, atol=5e-3)

    print("KERNEL_OK")
</pallas_src>

<mosaic_0001>
module attributes {stable_mosaic.version = 11 : i64} {
  func.func @_ce_kernel(%arg0: i32, %arg1: memref<20x128xf32, #tpu.memory_space<vmem>>, %arg2: memref<1x128xi32, #tpu.memory_space<vmem>>, %arg3: memref<20x1xf32, #tpu.memory_space<vmem>>, %arg4: memref<1x1xf32, #tpu.memory_space<vmem>>, %arg5: memref<1x1xf32, #tpu.memory_space<vmem>>, %arg6: memref<1x1xf32, #tpu.memory_space<vmem>>) attributes {dimension_semantics = [#tpu.dimension_semantics<arbitrary>], iteration_bounds = array<i64: 1>, scalar_prefetch = 0 : i64, scratch_operands = 2 : i64, tpu.core_type = #tpu.core_type<tc>, window_params = [{transform_indices = @transform_0, window_bounds = array<i64: 20, 128>}, {transform_indices = @transform_1, window_bounds = array<i64: 1, 128>}, {pipeline_mode = #tpu.pipeline_mode<synchronous>, transform_indices = @transform_2, window_bounds = array<i64: 20, 1>}, {pipeline_mode = #tpu.pipeline_mode<synchronous>, transform_indices = @transform_3, window_bounds = array<i64: 1, 1>}]} {
    %c0_i32 = arith.constant 0 : i32
    %0 = arith.cmpi eq, %arg0, %c0_i32 : i32
    %1 = arith.extui %0 : i1 to i32
    %c0_i32_0 = arith.constant 0 : i32
    %2 = arith.cmpi ne, %1, %c0_i32_0 : i32
    scf.if %2 {
      %cst_21 = arith.constant 0.000000e+00 : f32
      %54 = vector.broadcast %cst_21 : f32 to vector<1x1xf32>
      %c0_22 = arith.constant 0 : index
      %c0_23 = arith.constant 0 : index
      %55 = vector.load %arg5[%c0_22, %c0_23] : memref<1x1xf32, #tpu.memory_space<vmem>>, vector<1x1xf32>
      tpu.vector_store %arg5[%c0_22, %c0_23], %54 {strides = array<i32>} : memref<1x1xf32, #tpu.memory_space<vmem>>, vector<1x1xf32>,
      %cst_24 = arith.constant 0.000000e+00 : f32
      %56 = vector.broadcast %cst_24 : f32 to vector<1x1xf32>
      %c0_25 = arith.constant 0 : index
      %c0_26 = arith.constant 0 : index
      %57 = vector.load %arg6[%c0_25, %c0_26] : memref<1x1xf32, #tpu.memory_space<vmem>>, vector<1x1xf32>
      tpu.vector_store %arg6[%c0_25, %c0_26], %56 {strides = array<i32>} : memref<1x1xf32, #tpu.memory_space<vmem>>, vector<1x1xf32>,
    } else {
    }
    %c0 = arith.constant 0 : index
    %c0_1 = arith.constant 0 : index
    %3 = vector.load %arg1[%c0, %c0_1] : memref<20x128xf32, #tpu.memory_space<vmem>>, vector<20x128xf32>
    %c0_2 = arith.constant 0 : index
    %c0_3 = arith.constant 0 : index
    %4 = vector.load %arg2[%c0_2, %c0_3] : memref<1x128xi32, #tpu.memory_space<vmem>>, vector<1x128xi32>
    %c0_4 = arith.constant 0 : index
    %c0_5 = arith.constant 0 : index
    %5 = vector.load %arg3[%c0_4, %c0_5] : memref<20x1xf32, #tpu.memory_space<vmem>>, vector<20x1xf32>
    %cst = arith.constant dense<0xFF800000> : vector<128xf32>
    %6 = vector.multi_reduction <maximumf>, %3, %cst [0] : vector<20x128xf32> to vector<128xf32>
    %7 = vector.shape_cast %6 : vector<128xf32> to vector<1x128xf32>
    %8 = vector.broadcast %7 : vector<1x128xf32> to vector<20x128xf32>
    %9 = arith.subf %3, %8 : vector<20x128xf32>
    %10 = math.exp %9 : vector<20x128xf32>
    %cst_6 = arith.constant dense<0.000000e+00> : vector<128xf32>
    %11 = vector.multi_reduction <add>, %10, %cst_6 [0] : vector<20x128xf32> to vector<128xf32>
    %12 = vector.shape_cast %11 : vector<128xf32> to vector<1x128xf32>
    %13 = math.log %12 : vector<1x128xf32>
    %14 = arith.addf %7, %13 : vector<1x128xf32>
    %15 = tpu.iota {dimensions = array<i32: 0>} : vector<20x128xi32>
    %16 = vector.broadcast %4 : vector<1x128xi32> to vector<20x128xi32>
    %17 = arith.cmpi eq, %15, %16 : vector<20x128xi32>
    %18 = arith.extui %17 : vector<20x128xi1> to vector<20x128xi32>
    %19 = arith.sitofp %18 : vector<20x128xi32> to vector<20x128xf32>
    %20 = arith.mulf %3, %19 : vector<20x128xf32>
    %cst_7 = arith.constant dense<0.000000e+00> : vector<128xf32>
    %21 = vector.multi_reduction <add>, %20, %cst_7 [0] : vector<20x128xf32> to vector<128xf32>
    %22 = vector.shape_cast %21 : vector<128xf32> to vector<1x128xf32>
    %23 = vector.broadcast %5 : vector<20x1xf32> to vector<20x128xf32>
    %24 = arith.mulf %23, %19 : vector<20x128xf32>
    %cst_8 = arith.constant dense<0.000000e+00> : vector<128xf32>
    %25 = vector.multi_reduction <add>, %24, %cst_8 [0] : vector<20x128xf32> to vector<128xf32>
    %26 = vector.shape_cast %25 : vector<128xf32> to vector<1x128xf32>
    %c253_i32 = arith.constant 253 : i32
    %27 = vector.broadcast %c253_i32 : i32 to vector<1x128xi32>
    %28 = arith.cmpi ne, %4, %27 : vector<1x128xi32>
    %29 = arith.extui %28 : vector<1x128xi1> to vector<1x128xi32>
    %30 = arith.sitofp %29 : vector<1x128xi32> to vector<1x128xf32>
    %c0_9 = arith.constant 0 : index
    %c0_10 = arith.constant 0 : index
    %31 = vector.load %arg5[%c0_9, %c0_10] : memref<1x1xf32, #tpu.memory_space<vmem>>, vector<1x1xf32>
    %32 = arith.subf %14, %22 : vector<1x128xf32>
    %33 = arith.mulf %32, %26 : vector<1x128xf32>
    %34 = arith.mulf %33, %30 : vector<1x128xf32>
    %35 = vector.shape_cast %34 : vector<1x128xf32> to vector<1x1x128xf32>
    %cst_11 = arith.constant dense<0.000000e+00> : vector<1xf32>
    %36 = vector.multi_reduction <add>, %35, %cst_11 [1, 2] : vector<1x1x128xf32> to vector<1xf32>
    %37 = vector.shape_cast %36 : vector<1xf32> to vector<1x1x1xf32>
    %38 = vector.extract %37[0, 0, 0] : f32 from vector<1x1x1xf32>
    %39 = vector.broadcast %38 : f32 to vector<1x1xf32>
    %40 = arith.addf %31, %39 : vector<1x1xf32>
    %c0_12 = arith.constant 0 : index
    %c0_13 = arith.constant 0 : index
    %41 = vector.load %arg5[%c0_12, %c0_13] : memref<1x1xf32, #tpu.memory_space<vmem>>, vector<1x1xf32>
    tpu.vector_store %arg5[%c0_12, %c0_13], %40 {strides = array<i32>} : memref<1x1xf32, #tpu.memory_space<vmem>>, vector<1x1xf32>,
    %c0_14 = arith.constant 0 : index
    %c0_15 = arith.constant 0 : index
    %42 = vector.load %arg6[%c0_14, %c0_15] : memref<1x1xf32, #tpu.memory_space<vmem>>, vector<1x1xf32>
    %43 = arith.mulf %26, %30 : vector<1x128xf32>
    %44 = vector.shape_cast %43 : vector<1x128xf32> to vector<1x1x128xf32>
    %cst_16 = arith.constant dense<0.000000e+00> : vector<1xf32>
    %45 = vector.multi_reduction <add>, %44, %cst_16 [1, 2] : vector<1x1x128xf32> to vector<1xf32>
    %46 = vector.shape_cast %45 : vector<1xf32> to vector<1x1x1xf32>
    %47 = vector.extract %46[0, 0, 0] : f32 from vector<1x1x1xf32>
    %48 = vector.broadcast %47 : f32 to vector<1x1xf32>
    %49 = arith.addf %42, %48 : vector<1x1xf32>
    %c0_17 = arith.constant 0 : index
    %c0_18 = arith.constant 0 : index
    %50 = vector.load %arg6[%c0_17, %c0_18] : memref<1x1xf32, #tpu.memory_space<vmem>>, vector<1x1xf32>
    tpu.vector_store %arg6[%c0_17, %c0_18], %49 {strides = array<i32>} : memref<1x1xf32, #tpu.memory_space<vmem>>, vector<1x1xf32>,
    %c0_i32_19 = arith.constant 0 : i32
    %51 = arith.cmpi eq, %arg0, %c0_i32_19 : i32
    %52 = arith.extui %51 : i1 to i32
    %c0_i32_20 = arith.constant 0 : i32
    %53 = arith.cmpi ne, %52, %c0_i32_20 : i32
    scf.if %53 {
      %c0_21 = arith.constant 0 : index
      %c0_22 = arith.constant 0 : index
      %54 = vector.load %arg5[%c0_21, %c0_22] : memref<1x1xf32, #tpu.memory_space<vmem>>, vector<1x1xf32>
      %c0_23 = arith.constant 0 : index
      %c0_24 = arith.constant 0 : index
      %55 = vector.load %arg6[%c0_23, %c0_24] : memref<1x1xf32, #tpu.memory_space<vmem>>, vector<1x1xf32>
      %cst_25 = arith.constant 0.000000e+00 : f32
      %56 = vector.broadcast %cst_25 : f32 to vector<1x1xf32>
      %57 = arith.cmpf ogt, %55, %56 : vector<1x1xf32>
      %58 = arith.divf %54, %55 : vector<1x1xf32>
      %cst_26 = arith.constant 0.000000e+00 : f32
      %59 = vector.broadcast %cst_26 : f32 to vector<1x1xf32>
      %60 = arith.select %57, %58, %59 : vector<1x1xi1>, vector<1x1xf32>
      %c0_27 = arith.constant 0 : index
      %c0_28 = arith.constant 0 : index
      %61 = vector.load %arg4[%c0_27, %c0_28] : memref<1x1xf32, #tpu.memory_space<vmem>>, vector<1x1xf32>
      tpu.vector_store %arg4[%c0_27, %c0_28], %60 {strides = array<i32>} : memref<1x1xf32, #tpu.memory_space<vmem>>, vector<1x1xf32>,
    } else {
    }
    return
  }
  func.func @transform_0(%arg0: i32) -> (i32, i32) {
    %c0_i32 = arith.constant 0 : i32
    %c0_i32_0 = arith.constant 0 : i32
    return %c0_i32, %arg0 : i32, i32
  }
  func.func @transform_1(%arg0: i32) -> (i32, i32) {
    %c0_i32 = arith.constant 0 : i32
    %c0_i32_0 = arith.constant 0 : i32
    return %c0_i32, %arg0 : i32, i32
  }
  func.func @transform_2(%arg0: i32) -> (i32, i32) {
    %c0_i32 = arith.constant 0 : i32
    %c0_i32_0 = arith.constant 0 : i32
    %c0_i32_1 = arith.constant 0 : i32
    return %c0_i32, %c0_i32_0 : i32, i32
  }
  func.func @transform_3(%arg0: i32) -> (i32, i32) {
    %c0_i32 = arith.constant 0 : i32
    %c0_i32_0 = arith.constant 0 : i32
    %c0_i32_1 = arith.constant 0 : i32
    return %c0_i32, %c0_i32_0 : i32, i32
  }
}

</mosaic_0001>

<llo_original>
// kernel: tpu_custom_call.1
$region0: #{tpu_custom_call.1}
  #allocation0 [shape = 'u32[]', space=smem, size = 0x4, offset = 0x4, fixed_abs, tag = 'smem constant byte address 0x4 - core index']
  #allocation1 [shape = 'u32[144,128]{1,0:T(1,128)}', space=vmem, size = 0x12000, scoped, tag = 'internal scratch']
  #allocation2 [shape = 'f32[1,1]{1,0:T(1,128)}', space=vmem, size = 0x200, scoped, tag = 'scratch operand']
  #allocation3 [shape = 'f32[1,1]{1,0:T(1,128)}', space=vmem, size = 0x200, scoped, tag = 'scratch operand']
  %s0 = inlined_call_operand.vmem [shape: f32[20,128], index: 0, kind: input, shape index: {}]
  %s1 = inlined_call_operand.vmem [shape: s32[1,128], index: 1, kind: input, shape index: {}]
  %s2 = inlined_call_operand.vmem [shape: f32[20,1], index: 2, kind: input, shape index: {}]
  %s3 = inlined_call_operand.hbm [shape: f32[1,1], index: 3, kind: output, shape index: {}]
  %s4 = sld [smem:[#allocation0]]
  $region30: #{tpu_custom_call.1} parent=0
    _
  %s6 = ssub.s32 1, %s4
  %s7 = scalar_select 0, %s6, %s4
  $region1: #{tpu_custom_call.1} parent=0
    #allocation4 [shape = 'u8[512]{0}', space=vmem, size = 0x400, scoped, tag = 'output window, operand 0, single buffered']
    #allocation5 [shape = 's32[1]{0}', space=sflag, size = 0x4, scoped, tag = 'scoped memory for tpu_custom_call.1']
    %8 = vsyncpa [#allocation5], 0
    // Predicated region
    $region2: #{tpu_custom_call.1} parent=1 // pred_check
      _
    $region3: #{tpu_custom_call.1} parent=1 // pred_check_branch
      %10 = sbr.rel (0) target = $region5
    $region4: #{tpu_custom_call.1} parent=1 // pred_region
      _
    $region5: #{tpu_custom_call.1} parent=1 // pred_fallthru
      _
    // Predicated region
    $region6: #{tpu_custom_call.1} parent=1 // pred_check
      _
    $region7: #{tpu_custom_call.1} parent=1 // pred_check_branch
      %12 = sbr.rel (0) target = $region9
    $region8: #{tpu_custom_call.1} parent=1 // pred_region
      _
    $region9: #{tpu_custom_call.1} parent=1 // pred_fallthru
      _
    // Predicated region
    $region10: #{tpu_custom_call.1} parent=1 // pred_check
      _
    $region11: #{tpu_custom_call.1} parent=1 // pred_check_branch
      %14 = sbr.rel (0) target = $region13
    $region12: #{tpu_custom_call.1} parent=1 // pred_region
      _
    $region13: #{tpu_custom_call.1} parent=1 // pred_fallthru
      _
    %p15 = scmp.eq.s32.totalorder 0, 0
    // Predicated region
    $region14: #{tpu_custom_call.1} parent=1 // pred_check
      %p16 = pneg %p15
    $region15: #{tpu_custom_call.1} parent=1 // pred_check_branch
      %18 = sbr.rel (%p16) target = $region17
    $region16: #{tpu_custom_call.1} parent=1 // pred_region
      %vm19 = vcmask 0
      %20 = vst.msk [vmem:[#allocation2] sm:$0x1] %vm19, 0.0
      %21 = vst.msk [vmem:[#allocation3] sm:$0x1] %vm19, 0.0
    $region17: #{tpu_custom_call.1} parent=1 // pred_fallthru
      _
    %v22 = vld [vmem:[%s0] sm:$0xff]
    %v23 = vld [vmem:[%s0 + $0x8] sm:$0xff]
    %v24 = vld [vmem:[%s0 + $0x10] sm:$0xf]
    %v25 = vld [vmem:[%s1] sm:$0x1]
    %v26 = vld [vmem:[%s2] sm:$0xff]
    %v27 = vld [vmem:[%s2 + $0x8] sm:$0xff]
    %v28 = vld [vmem:[%s2 + $0x10] sm:$0xf]
    %vm29 = vcmask 1043456
    %v30 = vsel %vm29, %v24, -inf
    %v31 = vmax.f32 %v22, %v23
    %v32 = vmax.f32 %v31, %v30
    %v33 = vrot.slane %v32, 4
    %v34 = vmax.f32 %v32, %v33
    %v35 = vrot.slane %v34, 2
    %v36 = vmax.f32 %v34, %v35
    %v37 = vrot.slane %v36, 1
    %v38 = vmax.f32 %v36, %v37
    %v39 = vsub.f32 %v22, %v38
    %v40 = vsub.f32 %v23, %v38
    %v41 = vsub.f32 %v24, %v38
    %v42 = vmul.f32 %v39, 1.442695
    %v43 = vpow.pop %v42
    %v44 = vmul.f32 %v40, 1.442695
    %v45 = vpow.pop %v44
    %v46 = vmul.f32 %v41, 1.442695
    %v47 = vpow.pop %v46
    %v48 = vadd.f32 %v43, %v45
    %v49 = vsel %vm29, %v47, 0.0
    %v50 = vadd.f32 %v48, %v49
    %v51 = vrot.slane %v50, 4
    %v52 = vadd.f32 %v50, %v51
    %v53 = vrot.slane %v52, 2
    %v54 = vadd.f32 %v52, %v53
    %v55 = vrot.slane %v54, 1
    %v56 = vadd.f32 %v54, %v55
    %v57 = vlog2.pop %v56
    %v58 = vmul.f32 %v57, 0.6931472
    %v59 = vadd.f32 %v38, %v58
    %v60 = vlaneseq
    %v61 = vshrl.u32 %v60, 7
    %v62 = vadd.s32 %v61, 8
    %v63 = vadd.s32 %v61, 16
    %v64 = vlaneseq
    %v65 = vshrl.u32 %v64, 7
    %v66 = vsub.s32 0, %v65
    %v67 = vrot.slane %v25, %v66
    %vm68 = vcmp.eq.s32.totalorder %v61, %v67
    %vm69 = vcmp.eq.s32.totalorder %v62, %v67
    %vm70 = vcmp.eq.s32.totalorder %v63, %v67
    %v71 = vsel %vm68, 1, 0
    %v72 = vsel %vm69, 1, 0
    %v73 = vsel %vm70, 1, 0
    %v74 = vcvt.s32.f32 %v71
    %v75 = vcvt.s32.f32 %v72
    %v76 = vcvt.s32.f32 %v73
    %v77 = vmul.f32 %v22, %v74
    %v78 = vmul.f32 %v23, %v75
    %v79 = vmul.f32 %v24, %v76
    %v80 = vadd.f32 %v77, %v78
    %v81 = vsel %vm29, %v79, 0.0
    %v82 = vadd.f32 %v80, %v81
    %v83 = vrot.slane %v82, 4
    %v84 = vadd.f32 %v82, %v83
    %v85 = vrot.slane %v84, 2
    %v86 = vadd.f32 %v84, %v85
    %v87 = vrot.slane %v86, 1
    %v88 = vadd.f32 %v86, %v87
    %90 = vset.pattern.permute.xlu0 0
    %91 = vperm.xlu0 %90, %v26
    %v92 = vpop.permute.xlu0 %91
    %95 = vset.pattern.permute.xlu0 0
    %96 = vperm.xlu0 %95, %v27
    %v97 = vpop.permute.xlu0 %96
    %100 = vset.pattern.permute.xlu0 0
    %101 = vperm.xlu0 %100, %v28
    %v102 = vpop.permute.xlu0 %101
    %v104 = vmul.f32 %v92, %v74
    %v105 = vmul.f32 %v97, %v75
    %v106 = vmul.f32 %v102, %v76
    %v107 = vadd.f32 %v104, %v105
    %v108 = vsel %vm29, %v106, 0.0
    %v109 = vadd.f32 %v107, %v108
    %v110 = vrot.slane %v109, 4
    %v111 = vadd.f32 %v109, %v110
    %v112 = vrot.slane %v111, 2
    %v113 = vadd.f32 %v111, %v112
    %v114 = vrot.slane %v113, 1
    %v115 = vadd.f32 %v113, %v114
    %vm116 = vcmp.ne.s32.totalorder %v25, 253
    %v117 = vsel %vm116, 1, 0
    %v118 = vcvt.s32.f32 %v117
    %v119 = vld [vmem:[#allocation2] sm:$0x1]
    %v120 = vsub.f32 %v59, %v88
    %v121 = vmul.f32 %v120, %v115
    %v122 = vmul.f32 %v121, %v118
    %vm123 = vcmask 1040384
    %v124 = vsel %vm123, %v122, 0.0
    %125 = vadd.xlane.f32.xlu0 %v124
    %v126 = vpop.xlane.xlu0 %125
    %v127 = vrot.slane %v126, 4
    %v128 = vadd.f32 %v126, %v127
    %v129 = vrot.slane %v128, 2
    %v130 = vadd.f32 %v128, %v129
    %v131 = vrot.slane %v130, 1
    %v132 = vadd.f32 %v130, %v131
    %s133 = vtos %v132
    %v134 = vstv %s133
    %v135 = vadd.f32 %v119, %v134
    %vm136 = vcmask 0
    %137 = vst.msk [vmem:[#allocation2] sm:$0x1] %vm136, %v135
    %v138 = vld [vmem:[#allocation3] sm:$0x1]
    %v139 = vmul.f32 %v115, %v118
    %v140 = vsel %vm123, %v139, 0.0
    %141 = vadd.xlane.f32.xlu0 %v140
    %v142 = vpop.xlane.xlu0 %141
    %v143 = vrot.slane %v142, 4
    %v144 = vadd.f32 %v142, %v143
    %v145 = vrot.slane %v144, 2
    %v146 = vadd.f32 %v144, %v145
    %v147 = vrot.slane %v146, 1
    %v148 = vadd.f32 %v146, %v147
    %s149 = vtos %v148
    %v150 = vstv %s149
    %v151 = vadd.f32 %v138, %v150
    %152 = vst.msk [vmem:[#allocation3] sm:$0x1] %vm136, %v151
    // Predicated region
    $region18: #{tpu_custom_call.1} parent=1 // pred_check
      %p153 = pneg %p15
    $region19: #{tpu_custom_call.1} parent=1 // pred_check_branch
      %155 = sbr.rel (%p153) target = $region21
    $region20: #{tpu_custom_call.1} parent=1 // pred_region
      %v156 = vld [vmem:[#allocation2] sm:$0x1]
      %v157 = vld [vmem:[#allocation3] sm:$0x1]
      %vm158 = vcmp.gt.f32.partialorder %v157, 0.0
      %v159 = vrcp.pop %v157
      %v160 = vmul.f32 %v156, %v159
      %v161 = vsel %vm158, %v160, 0.0
      %162 = vst.msk [vmem:[#allocation4] sm:$0x1] %vm136, %v161
    $region21: #{tpu_custom_call.1} parent=1 // pred_fallthru
      _
    // Predicated region
    $region22: #{tpu_custom_call.1} parent=1 // pred_check
      _
    $region23: #{tpu_custom_call.1} parent=1 // pred_check_branch
      %164 = sbr.rel (0) target = $region25
    $region24: #{tpu_custom_call.1} parent=1 // pred_region
      %s166 = ssub.s32 16, 16
      %167 = vsyncadd [#allocation5], %s166
      %s169 = sshll.u32 [#allocation4], 4
      %s170 = int_to_ptr.vmem [resolvable:$true] %s169
      %172 = dma.vmem_to_hbm [thread:$0]  %s170, 16, %s3, [#allocation5]
    $region25: #{tpu_custom_call.1} parent=1 // pred_fallthru
      _
    // Predicated region
    $region26: #{tpu_custom_call.1} parent=1 // pred_check
      _
    $region27: #{tpu_custom_call.1} parent=1 // pred_check_branch
      %174 = sbr.rel (0) target = $region29
    $region28: #{tpu_custom_call.1} parent=1 // pred_region
      %175 = dma.done [#allocation5], 16
    $region29: #{tpu_custom_call.1} parent=1 // pred_fallthru
      _
    %176 = vsyncpa [#allocation5], 1

</llo_original>
